<compile_context>
chip_gen: v6e
topology: v6e:2x2x1
jax: 0.10.0
libtpu: 0.0.40
codegen_flags: <defaults>
</compile_context>

<pallas_src>
from typing import NamedTuple, Optional, Tuple

import jax
import jax.numpy as jnp
from jax.experimental import pallas as pl
from jax.experimental.pallas import tpu as pltpu

LANE = 128
SUBLANE = 8


def _round_up(v, m):
    return (v + m - 1) // m * m


class LSTMParams(NamedTuple):
    w_x: jax.Array        # (H_in, 4*H_p) compute dtype, gate cols padded, 0.5 folded
    w_h: jax.Array        # (H,    4*H_p) compute dtype, gate cols padded, 0.5 folded
    b: jax.Array          # (1,    4*H_p) f32, gate cols padded, 0.5 folded
    hidden_size: int


def prepare_lstm_params(w_x, w_h, b, *, compute_dtype=jnp.bfloat16) -> LSTMParams:
    """One-time parameter prep (hoisted out of the forward pass).

    w_x: (H_in, 4H), w_h: (H, 4H), b: (4H,) or (1, 4H), gate order [i, f, g, o].
    Pads each gate's column block to a multiple of 128 lanes (zero columns),
    folds the 0.5 pre-scale of sigmoid(g) = 0.5*(tanh(0.5*g)+1) into the
    i/f/o columns, and casts weights to the MXU compute dtype.
    """
    H_in = w_x.shape[0]
    H = w_h.shape[0]
    assert w_x.shape == (H_in, 4 * H) and w_h.shape == (H, 4 * H)
    b = jnp.reshape(b, (1, 4 * H))
    H_p = _round_up(H, LANE)

    # gate order [input, forget, cell, output]; 0.5 folded into the sigmoid gates
    scale = jnp.array([0.5, 0.5, 1.0, 0.5], jnp.float32).reshape(1, 4, 1)

    def pad_gate_cols(w):
        rows = w.shape[0]
        wr = w.astype(jnp.float32).reshape(rows, 4, H) * scale
        wp = jnp.zeros((rows, 4, H_p), jnp.float32).at[:, :, :H].set(wr)
        return wp.reshape(rows, 4 * H_p)

    w_x_p = pad_gate_cols(w_x).astype(compute_dtype)
    w_h_p = pad_gate_cols(w_h).astype(compute_dtype)
    b_p = jnp.zeros((1, 4, H_p), jnp.float32).at[:, :, :H].set(
        b.astype(jnp.float32).reshape(1, 4, H) * scale).reshape(1, 4 * H_p)
    return LSTMParams(w_x=w_x_p, w_h=w_h_p, b=b_p, hidden_size=H)


def lstm_cell_kernel(x_ref, h0_ref, c0_ref, wx_ref, wh_ref, b_ref,
                     h1_ref, c1_ref):
    """Two bf16 MXU dots (f32 accumulation) + f32 gate epilogue.

    x_ref : (TN, H_in)   caller dtype, cast to compute dtype in-kernel
    h0_ref: (TN, H)      caller dtype
    c0_ref: (TN, H)      caller dtype
    wx_ref: (H_in, 4*Hp) resident, compute dtype, Buffered(1)
    wh_ref: (H,    4*Hp) resident, compute dtype, Buffered(1)
    b_ref : (1,    4*Hp) resident, f32, Buffered(1)
    h1_ref: (TN, H)      bf16 (or h1_dtype)
    c1_ref: (TN, H)      f32
    """
    cdt = wx_ref.dtype
    gates = jnp.dot(x_ref[...].astype(cdt), wx_ref[...],
                    preferred_element_type=jnp.float32)
    gates = gates + jnp.dot(h0_ref[...].astype(cdt), wh_ref[...],
                            preferred_element_type=jnp.float32)
    gates = gates + b_ref[...]

    H = c1_ref.shape[-1]
    Hp = gates.shape[-1] // 4

    # 0.5 pre-scale already folded into W/b for i/f/o:
    # sigmoid(g) == 0.5 * (tanh(0.5 * g) + 1): single EUP push, no divide.
    g_in = 0.5 * (jnp.tanh(gates[:, 0 * Hp:0 * Hp + H]) + 1.0)
    g_fg = 0.5 * (jnp.tanh(gates[:, 1 * Hp:1 * Hp + H]) + 1.0)
    g_cl = jnp.tanh(gates[:, 2 * Hp:2 * Hp + H])
    g_ot = 0.5 * (jnp.tanh(gates[:, 3 * Hp:3 * Hp + H]) + 1.0)

    c0 = c0_ref[...].astype(jnp.float32)
    c1 = g_fg * c0 + g_in * g_cl
    h1 = g_ot * jnp.tanh(c1)

    c1_ref[...] = c1.astype(c1_ref.dtype)
    h1_ref[...] = h1.astype(h1_ref.dtype)


def _vmem_limit_bytes(buffer_bytes):
    """Buffer footprint + headroom, clamped to ~85% of physical VMEM."""
    phys = 64 * 1024 * 1024  # conservative default (v7x per-core)
    try:
        info = pltpu.get_tpu_info()
        phys = int(getattr(info, "vmem_capacity_bytes", phys))
    except Exception:
        pass
    cap = int(phys * 0.85)
    want = int(buffer_bytes * 1.5) + (4 << 20)
    return min(max(want, 32 << 20), cap)


def lstm_cell(x, state: Optional[Tuple[jax.Array, jax.Array]], params: LSTMParams,
              *, tile_n=512, h1_dtype=jnp.bfloat16):
    """x: (N, H_in) or (H_in,); state: (h0, c0) with (N, H) or (H,) each, or None.

    Returns (h1, c1): h1 in `h1_dtype` (bf16 by default, halves writeback and
    feeds the next step's bf16 matmul), c1 in f32.
    """
    is_batched = x.ndim == 2
    if not is_batched:
        x = x[None]

    N, H_in = x.shape
    H = params.hidden_size
    H_p = params.w_h.shape[-1] // 4

    if state is None:
        h0 = jnp.zeros((N, H), x.dtype)
        c0 = jnp.zeros((N, H), x.dtype)
    else:
        h0, c0 = state
        if not is_batched:
            h0, c0 = h0[None], c0[None]

    # --- batch tiling: at least 2 grid steps when the batch allows (v7x) ---
    n_aligned = _round_up(max(N, 1), SUBLANE)
    tile_n = max(SUBLANE, min(_round_up(tile_n, SUBLANE), n_aligned))
    if n_aligned // tile_n < 2 and n_aligned >= 2 * SUBLANE:
        tile_n = _round_up(pl.cdiv(n_aligned, 2), SUBLANE)
    N_p = _round_up(N, tile_n)
    grid = (N_p // tile_n,)

    # pad the batch dim only when needed (zero rows are independent/harmless)
    if N_p != N:
        pad = ((0, N_p - N), (0, 0))
        x = jnp.pad(x, pad)
        h0 = jnp.pad(h0, pad)
        c0 = jnp.pad(c0, pad)

    # --- VMEM budget from actual buffers (double-buffered activations,
    #     single-buffered residents, f32 gates temporary) ---
    isz = lambda a: jnp.dtype(a.dtype).itemsize
    w_bytes = (params.w_x.size * isz(params.w_x)
               + params.w_h.size * isz(params.w_h)
               + params.b.size * isz(params.b))
    act_bytes = 2 * tile_n * (H_in * isz(x) + H * (isz(h0) + isz(c0)))
    out_bytes = 2 * tile_n * H * (jnp.dtype(h1_dtype).itemsize + 4)
    gates_bytes = 2 * tile_n * 4 * H_p * 4
    vmem_limit = _vmem_limit_bytes(w_bytes + act_bytes + out_bytes + gates_bytes)

    h1_p, c1_p = pl.pallas_call(
        lstm_cell_kernel,
        out_shape=(
            jax.ShapeDtypeStruct((N_p, H), h1_dtype),
            jax.ShapeDtypeStruct((N_p, H), jnp.float32),
        ),
        grid=grid,
        in_specs=[
            pl.BlockSpec((tile_n, H_in), lambda i: (i, 0)),          # x tile
            pl.BlockSpec((tile_n, H), lambda i: (i, 0)),             # h0 tile
            pl.BlockSpec((tile_n, H), lambda i: (i, 0)),             # c0 tile
            pl.BlockSpec((H_in, 4 * H_p), lambda i: (0, 0),          # resident Wx
                         pipeline_mode=pl.Buffered(1)),
            pl.BlockSpec((H, 4 * H_p), lambda i: (0, 0),             # resident Wh
                         pipeline_mode=pl.Buffered(1)),
            pl.BlockSpec((1, 4 * H_p), lambda i: (0, 0),             # resident bias
                         pipeline_mode=pl.Buffered(1)),
        ],
        out_specs=(
            pl.BlockSpec((tile_n, H), lambda i: (i, 0)),
            pl.BlockSpec((tile_n, H), lambda i: (i, 0)),
        ),
        compiler_params=pltpu.CompilerParams(
            dimension_semantics=("parallel",),   # megacore batch sharding on v7x
            vmem_limit_bytes=vmem_limit,
        ),
    )(x, h0, c0, params.w_x, params.w_h, params.b)

    h1 = h1_p[:N] if N_p != N else h1_p
    c1 = c1_p[:N] if N_p != N else c1_p
    if not is_batched:
        h1, c1 = h1[0], c1[0]
    return h1, c1


def _init_params(key, input_size, hidden_size, dtype=jnp.float32):
    """Deterministic per-gate Linear params, PyTorch-style uniform init.

    nn.Linear(in, out): W ~ U(-1/sqrt(in), 1/sqrt(in)), same for bias.
    Gate order: [input, forget, cell, output]. Combined bias = b_x + b_h.
    """
    keys = jax.random.split(key, 16)
    bound_x = 1.0 / (input_size ** 0.5)
    bound_h = 1.0 / (hidden_size ** 0.5)

    w_x_parts, w_h_parts, b_parts = [], [], []
    ki = iter(keys)
    for _ in range(4):  # 4 gates
        w_x_parts.append(jax.random.uniform(
            next(ki), (input_size, hidden_size), dtype, -bound_x, bound_x))
        b_x = jax.random.uniform(
            next(ki), (hidden_size,), dtype, -bound_x, bound_x)
        w_h_parts.append(jax.random.uniform(
            next(ki), (hidden_size, hidden_size), dtype, -bound_h, bound_h))
        b_h = jax.random.uniform(
            next(ki), (hidden_size,), dtype, -bound_h, bound_h)
        b_parts.append(b_x + b_h)

    w_x = jnp.concatenate(w_x_parts, axis=1)          # (H_in, 4H)
    w_h = jnp.concatenate(w_h_parts, axis=1)          # (H_out, 4H)
    b = jnp.concatenate(b_parts, axis=0)[None, :]     # (1, 4H)
    return w_x, w_h, b


def _reference(x, h0, c0, w_x, w_h, b, compute_dtype=jnp.bfloat16):
    """Pure-JAX reference mimicking the kernel's bf16 MXU inputs / f32 acc.

    Note: (0.5*W) cast to bf16 == 0.5*(W cast to bf16) exactly (power of two),
    so quantizing the unscaled weights matches the kernel's folded weights.
    """
    f32 = jnp.float32
    q = lambda a: a.astype(compute_dtype).astype(f32)
    gates = q(x) @ q(w_x) + q(h0) @ q(w_h) + b.astype(f32)
    H = h0.shape[-1]
    g_in = jax.nn.sigmoid(gates[:, 0 * H:1 * H])
    g_fg = jax.nn.sigmoid(gates[:, 1 * H:2 * H])
    g_cl = jnp.tanh(gates[:, 2 * H:3 * H])
    g_ot = jax.nn.sigmoid(gates[:, 3 * H:4 * H])
    c1 = g_fg * c0.astype(f32) + g_in * g_cl
    h1 = g_ot * jnp.tanh(c1)
    return h1, c1


if __name__ == "__main__":
    batch_size = 8
    input_size = 16
    hidden_size = 32

    key = jax.random.PRNGKey(0)
    k_x, k_h, k_c, k_p = jax.random.split(key, 4)

    x = jax.random.normal(k_x, (batch_size, input_size), jnp.float32)
    h0 = jax.random.normal(k_h, (batch_size, hidden_size), jnp.float32)
    c0 = jax.random.normal(k_c, (batch_size, hidden_size), jnp.float32)

    w_x, w_h, b = _init_params(k_p, input_size, hidden_size)
    params = prepare_lstm_params(w_x, w_h, b)   # one-time prep, hoisted out of forward

    h1, c1 = lstm_cell(x, (h0, c0), params)
    jax.block_until_ready((h1, c1))

    h1_ref, c1_ref = _reference(x, h0, c0, w_x, w_h, b)
    assert h1.shape == (batch_size, hidden_size)
    assert c1.shape == (batch_size, hidden_size)
    assert c1.dtype == jnp.float32
    # c1 stays f32 end-to-end -> tight tolerance; h1 is emitted in bf16.
    assert jnp.allclose(c1, c1_ref, atol=2e-3, rtol=2e-3)
    assert jnp.allclose(h1.astype(jnp.float32), h1_ref, atol=1e-2, rtol=1e-2)

    print("KERNEL_OK")
</pallas_src>

<mosaic_0001>
module attributes {stable_mosaic.version = 11 : i64} {
  func.func @lstm_cell_kernel(%arg0: i32, %arg1: memref<8x16xf32, #tpu.memory_space<vmem>>, %arg2: memref<8x32xf32, #tpu.memory_space<vmem>>, %arg3: memref<8x32xf32, #tpu.memory_space<vmem>>, %arg4: memref<16x512xbf16, #tpu.memory_space<vmem>>, %arg5: memref<32x512xbf16, #tpu.memory_space<vmem>>, %arg6: memref<1x512xf32, #tpu.memory_space<vmem>>, %arg7: memref<8x32xbf16, #tpu.memory_space<vmem>>, %arg8: memref<8x32xf32, #tpu.memory_space<vmem>>) attributes {dimension_semantics = [#tpu.dimension_semantics<parallel>], iteration_bounds = array<i64: 1>, scalar_prefetch = 0 : i64, scratch_operands = 0 : i64, tpu.core_type = #tpu.core_type<tc>, window_params = [{transform_indices = @transform_0, window_bounds = array<i64: 8, 16>}, {transform_indices = @transform_1, window_bounds = array<i64: 8, 32>}, {transform_indices = @transform_2, window_bounds = array<i64: 8, 32>}, {pipeline_mode = #tpu.pipeline_mode<synchronous>, transform_indices = @transform_3, window_bounds = array<i64: 16, 512>}, {pipeline_mode = #tpu.pipeline_mode<synchronous>, transform_indices = @transform_4, window_bounds = array<i64: 32, 512>}, {pipeline_mode = #tpu.pipeline_mode<synchronous>, transform_indices = @transform_5, window_bounds = array<i64: 1, 512>}, {transform_indices = @transform_6, window_bounds = array<i64: 8, 32>}, {transform_indices = @transform_7, window_bounds = array<i64: 8, 32>}]} {
    %c0 = arith.constant 0 : index
    %c0_0 = arith.constant 0 : index
    %0 = vector.load %arg1[%c0, %c0_0] : memref<8x16xf32, #tpu.memory_space<vmem>>, vector<8x16xf32>
    %1 = arith.truncf %0 : vector<8x16xf32> to vector<8x16xbf16>
    %c0_1 = arith.constant 0 : index
    %c0_2 = arith.constant 0 : index
    %2 = vector.load %arg4[%c0_1, %c0_2] : memref<16x512xbf16, #tpu.memory_space<vmem>>, vector<16x512xbf16>
    %cst = arith.constant dense<0.000000e+00> : vector<8x512xf32>
    %3 = tpu.matmul %1, %2, %cst {dimension_numbers = #tpu.dot_dimension_numbers<[1], [0], [0], [1], [0, 0, 1, 1], [], []>} : vector<8x16xbf16>, vector<16x512xbf16>, vector<8x512xf32> -> vector<8x512xf32>
    %c0_3 = arith.constant 0 : index
    %c0_4 = arith.constant 0 : index
    %4 = vector.load %arg2[%c0_3, %c0_4] : memref<8x32xf32, #tpu.memory_space<vmem>>, vector<8x32xf32>
    %5 = arith.truncf %4 : vector<8x32xf32> to vector<8x32xbf16>
    %c0_5 = arith.constant 0 : index
    %c0_6 = arith.constant 0 : index
    %6 = vector.load %arg5[%c0_5, %c0_6] : memref<32x512xbf16, #tpu.memory_space<vmem>>, vector<32x512xbf16>
    %cst_7 = arith.constant dense<0.000000e+00> : vector<8x512xf32>
    %7 = tpu.matmul %5, %6, %cst_7 {dimension_numbers = #tpu.dot_dimension_numbers<[1], [0], [0], [1], [0, 0, 1, 1], [], []>} : vector<8x32xbf16>, vector<32x512xbf16>, vector<8x512xf32> -> vector<8x512xf32>
    %8 = arith.addf %3, %7 : vector<8x512xf32>
    %c0_8 = arith.constant 0 : index
    %c0_9 = arith.constant 0 : index
    %9 = vector.load %arg6[%c0_8, %c0_9] : memref<1x512xf32, #tpu.memory_space<vmem>>, vector<1x512xf32>
    %10 = vector.broadcast %9 : vector<1x512xf32> to vector<8x512xf32>
    %11 = arith.addf %8, %10 : vector<8x512xf32>
    %12 = vector.extract_strided_slice %11 {offsets = [0, 0], sizes = [8, 32], strides = [1, 1]} : vector<8x512xf32> to vector<8x32xf32>
    %13 = math.tanh %12 : vector<8x32xf32>
    %cst_10 = arith.constant 1.000000e+00 : f32
    %14 = vector.broadcast %cst_10 : f32 to vector<8x32xf32>
    %15 = arith.addf %13, %14 : vector<8x32xf32>
    %cst_11 = arith.constant 5.000000e-01 : f32
    %16 = vector.broadcast %cst_11 : f32 to vector<8x32xf32>
    %17 = arith.mulf %16, %15 : vector<8x32xf32>
    %18 = vector.extract_strided_slice %11 {offsets = [0, 128], sizes = [8, 32], strides = [1, 1]} : vector<8x512xf32> to vector<8x32xf32>
    %19 = math.tanh %18 : vector<8x32xf32>
    %cst_12 = arith.constant 1.000000e+00 : f32
    %20 = vector.broadcast %cst_12 : f32 to vector<8x32xf32>
    %21 = arith.addf %19, %20 : vector<8x32xf32>
    %cst_13 = arith.constant 5.000000e-01 : f32
    %22 = vector.broadcast %cst_13 : f32 to vector<8x32xf32>
    %23 = arith.mulf %22, %21 : vector<8x32xf32>
    %24 = vector.extract_strided_slice %11 {offsets = [0, 256], sizes = [8, 32], strides = [1, 1]} : vector<8x512xf32> to vector<8x32xf32>
    %25 = math.tanh %24 : vector<8x32xf32>
    %26 = vector.extract_strided_slice %11 {offsets = [0, 384], sizes = [8, 32], strides = [1, 1]} : vector<8x512xf32> to vector<8x32xf32>
    %27 = math.tanh %26 : vector<8x32xf32>
    %cst_14 = arith.constant 1.000000e+00 : f32
    %28 = vector.broadcast %cst_14 : f32 to vector<8x32xf32>
    %29 = arith.addf %27, %28 : vector<8x32xf32>
    %cst_15 = arith.constant 5.000000e-01 : f32
    %30 = vector.broadcast %cst_15 : f32 to vector<8x32xf32>
    %31 = arith.mulf %30, %29 : vector<8x32xf32>
    %c0_16 = arith.constant 0 : index
    %c0_17 = arith.constant 0 : index
    %32 = vector.load %arg3[%c0_16, %c0_17] : memref<8x32xf32, #tpu.memory_space<vmem>>, vector<8x32xf32>
    %33 = arith.mulf %23, %32 : vector<8x32xf32>
    %34 = arith.mulf %17, %25 : vector<8x32xf32>
    %35 = arith.addf %33, %34 : vector<8x32xf32>
    %36 = math.tanh %35 : vector<8x32xf32>
    %37 = arith.mulf %31, %36 : vector<8x32xf32>
    %c0_18 = arith.constant 0 : index
    %c0_19 = arith.constant 0 : index
    %38 = vector.load %arg8[%c0_18, %c0_19] : memref<8x32xf32, #tpu.memory_space<vmem>>, vector<8x32xf32>
    tpu.vector_store %arg8[%c0_18, %c0_19], %35 {strides = array<i32>} : memref<8x32xf32, #tpu.memory_space<vmem>>, vector<8x32xf32>,
    %39 = arith.truncf %37 : vector<8x32xf32> to vector<8x32xbf16>
    %c0_20 = arith.constant 0 : index
    %c0_21 = arith.constant 0 : index
    %40 = vector.load %arg7[%c0_20, %c0_21] : memref<8x32xbf16, #tpu.memory_space<vmem>>, vector<8x32xbf16>
    tpu.vector_store %arg7[%c0_20, %c0_21], %39 {strides = array<i32>} : memref<8x32xbf16, #tpu.memory_space<vmem>>, vector<8x32xbf16>,
    return
  }
  func.func @transform_0(%arg0: i32) -> (i32, i32) {
    %c0_i32 = arith.constant 0 : i32
    %c0_i32_0 = arith.constant 0 : i32
    return %arg0, %c0_i32 : i32, i32
  }
  func.func @transform_1(%arg0: i32) -> (i32, i32) {
    %c0_i32 = arith.constant 0 : i32
    %c0_i32_0 = arith.constant 0 : i32
    return %arg0, %c0_i32 : i32, i32
  }
  func.func @transform_2(%arg0: i32) -> (i32, i32) {
    %c0_i32 = arith.constant 0 : i32
    %c0_i32_0 = arith.constant 0 : i32
    return %arg0, %c0_i32 : i32, i32
  }
  func.func @transform_3(%arg0: i32) -> (i32, i32) {
    %c0_i32 = arith.constant 0 : i32
    %c0_i32_0 = arith.constant 0 : i32
    %c0_i32_1 = arith.constant 0 : i32
    return %c0_i32, %c0_i32_0 : i32, i32
  }
  func.func @transform_4(%arg0: i32) -> (i32, i32) {
    %c0_i32 = arith.constant 0 : i32
    %c0_i32_0 = arith.constant 0 : i32
    %c0_i32_1 = arith.constant 0 : i32
    return %c0_i32, %c0_i32_0 : i32, i32
  }
  func.func @transform_5(%arg0: i32) -> (i32, i32) {
    %c0_i32 = arith.constant 0 : i32
    %c0_i32_0 = arith.constant 0 : i32
    %c0_i32_1 = arith.constant 0 : i32
    return %c0_i32, %c0_i32_0 : i32, i32
  }
  func.func @transform_6(%arg0: i32) -> (i32, i32) {
    %c0_i32 = arith.constant 0 : i32
    %c0_i32_0 = arith.constant 0 : i32
    return %arg0, %c0_i32 : i32, i32
  }
  func.func @transform_7(%arg0: i32) -> (i32, i32) {
    %c0_i32 = arith.constant 0 : i32
    %c0_i32_0 = arith.constant 0 : i32
    return %arg0, %c0_i32 : i32, i32
  }
}

</mosaic_0001>

<llo_original>
// kernel: tpu_custom_call.1
$region0: #{tpu_custom_call.1}
  #allocation0 [shape = 'u32[]', space=smem, size = 0x4, offset = 0x4, fixed_abs, tag = 'smem constant byte address 0x4 - core index']
  #allocation1 [shape = 'u32[144,128]{1,0:T(1,128)}', space=vmem, size = 0x12000, scoped, tag = 'internal scratch']
  %s0 = inlined_call_operand.hbm [shape: f32[8,16], index: 0, kind: input, shape index: {}]
  %s1 = inlined_call_operand.hbm [shape: f32[8,32], index: 1, kind: input, shape index: {}]
  %s2 = inlined_call_operand.hbm [shape: f32[8,32], index: 2, kind: input, shape index: {}]
  %s3 = inlined_call_operand.hbm [shape: bf16[16,512], index: 3, kind: input, shape index: {}]
  %s4 = inlined_call_operand.hbm [shape: bf16[32,512], index: 4, kind: input, shape index: {}]
  %s5 = inlined_call_operand.vmem [shape: f32[1,512], index: 5, kind: input, shape index: {}]
  %s6 = inlined_call_operand.hbm [shape: bf16[8,32], index: 6, kind: output, shape index: {0}]
  %s7 = inlined_call_operand.hbm [shape: f32[8,32], index: 7, kind: output, shape index: {1}]
  %8 = xla_tuple %s6, %s7
  %s9 = sld [smem:[#allocation0]]
  $region62: #{tpu_custom_call.1} parent=0
    _
  %s11 = ssub.s32 1, %s9
  %s12 = scalar_select 0, %s11, %s9
  $region1: #{tpu_custom_call.1} parent=0
    #allocation2 [shape = 'u8[4096]{0}', space=vmem, size = 0x1000, scoped, tag = 'input window, operand 0, single buffered']
    #allocation3 [shape = 's32[1]{0}', space=sflag, size = 0x4, scoped, tag = 'scoped memory for tpu_custom_call.1']
    #allocation4 [shape = 's32[1]{0}', space=sflag, size = 0x4, scoped, tag = 'scoped memory for tpu_custom_call.1']
    #allocation5 [shape = 'u8[4096]{0}', space=vmem, size = 0x1000, scoped, tag = 'input window, operand 1, single buffered']
    #allocation6 [shape = 's32[1]{0}', space=sflag, size = 0x4, scoped, tag = 'scoped memory for tpu_custom_call.1']
    #allocation7 [shape = 'u8[4096]{0}', space=vmem, size = 0x1000, scoped, tag = 'input window, operand 2, single buffered']
    #allocation8 [shape = 'u8[16384]{0}', space=vmem, size = 0x4000, scoped, tag = 'input window, operand 3, single buffered']
    #allocation9 [shape = 's32[1]{0}', space=sflag, size = 0x4, scoped, tag = 'scoped memory for tpu_custom_call.1']
    #allocation10 [shape = 'u8[32768]{0}', space=vmem, size = 0x8000, scoped, tag = 'input window, operand 4, single buffered']
    #allocation11 [shape = 'u8[2048]{0}', space=vmem, size = 0x800, scoped, tag = 'output window, operand 0, single buffered']
    #allocation12 [shape = 'u8[4096]{0}', space=vmem, size = 0x1000, scoped, tag = 'output window, operand 1, single buffered']
    #allocation13 [shape = 's32[1]{0}', space=sflag, size = 0x4, scoped, tag = 'scoped memory for tpu_custom_call.1']
    %13 = vsyncpa [#allocation3], 0
    %14 = vsyncpa [#allocation6], 0
    %15 = vsyncpa [#allocation9], 0
    %16 = vsyncpa [#allocation4], 0
    %17 = vsyncpa [#allocation13], 0
    // Predicated region
    $region2: #{tpu_custom_call.1} parent=1 // pred_check
      _
    $region3: #{tpu_custom_call.1} parent=1 // pred_check_branch
      %19 = sbr.rel (0) target = $region5
    $region4: #{tpu_custom_call.1} parent=1 // pred_region
      %s21 = ssub.s32 128, 128
      %22 = vsyncadd [#allocation3], %s21
      %s24 = sshll.u32 [#allocation2], 4
      %s25 = int_to_ptr.vmem [resolvable:$true] %s24
      %27 = dma.hbm_to_vmem [thread:$0]  %s0, 128, %s25, [#allocation3]
    $region5: #{tpu_custom_call.1} parent=1 // pred_fallthru
      _
    // Predicated region
    $region6: #{tpu_custom_call.1} parent=1 // pred_check
      _
    $region7: #{tpu_custom_call.1} parent=1 // pred_check_branch
      %29 = sbr.rel (0) target = $region9
    $region8: #{tpu_custom_call.1} parent=1 // pred_region
      %s31 = ssub.s32 128, 128
      %32 = vsyncadd [#allocation6], %s31
      %s34 = sshll.u32 [#allocation5], 4
      %s35 = int_to_ptr.vmem [resolvable:$true] %s34
      %37 = dma.hbm_to_vmem [thread:$0]  %s1, 128, %s35, [#allocation6]
    $region9: #{tpu_custom_call.1} parent=1 // pred_fallthru
      _
    // Predicated region
    $region10: #{tpu_custom_call.1} parent=1 // pred_check
      _
    $region11: #{tpu_custom_call.1} parent=1 // pred_check_branch
      %39 = sbr.rel (0) target = $region13
    $region12: #{tpu_custom_call.1} parent=1 // pred_region
      %s41 = ssub.s32 128, 128
      %42 = vsyncadd [#allocation6], %s41
      %s44 = sshll.u32 [#allocation7], 4
      %s45 = int_to_ptr.vmem [resolvable:$true] %s44
      %47 = dma.hbm_to_vmem [thread:$0]  %s2, 128, %s45, [#allocation6]
    $region13: #{tpu_custom_call.1} parent=1 // pred_fallthru
      _
    // Predicated region
    $region14: #{tpu_custom_call.1} parent=1 // pred_check
      _
    $region15: #{tpu_custom_call.1} parent=1 // pred_check_branch
      %49 = sbr.rel (0) target = $region17
    $region16: #{tpu_custom_call.1} parent=1 // pred_region
      %s51 = ssub.s32 512, 512
      %52 = vsyncadd [#allocation9], %s51
      %s53 = sshll.u32 [#allocation8], 4
      %s54 = int_to_ptr.vmem [resolvable:$true] %s53
      %59 = dma.hbm_to_vmem [thread:$0]  %s3, 512, %s54, [#allocation9], 256, 256, 16
    $region17: #{tpu_custom_call.1} parent=1 // pred_fallthru
      _
    // Predicated region
    $region18: #{tpu_custom_call.1} parent=1 // pred_check
      _
    $region19: #{tpu_custom_call.1} parent=1 // pred_check_branch
      %61 = sbr.rel (0) target = $region21
    $region20: #{tpu_custom_call.1} parent=1 // pred_region
      %s63 = ssub.s32 1024, 1024
      %64 = vsyncadd [#allocation9], %s63
      %s65 = sshll.u32 [#allocation10], 4
      %s66 = int_to_ptr.vmem [resolvable:$true] %s65
      %71 = dma.hbm_to_vmem [thread:$0]  %s4, 1024, %s66, [#allocation9], 256, 256, 16
    $region21: #{tpu_custom_call.1} parent=1 // pred_fallthru
      _
    // Predicated region
    $region22: #{tpu_custom_call.1} parent=1 // pred_check
      _
    $region23: #{tpu_custom_call.1} parent=1 // pred_check_branch
      %73 = sbr.rel (0) target = $region25
    $region24: #{tpu_custom_call.1} parent=1 // pred_region
      _
    $region25: #{tpu_custom_call.1} parent=1 // pred_fallthru
      _
    // Predicated region
    $region26: #{tpu_custom_call.1} parent=1 // pred_check
      _
    $region27: #{tpu_custom_call.1} parent=1 // pred_check_branch
      %75 = sbr.rel (0) target = $region29
    $region28: #{tpu_custom_call.1} parent=1 // pred_region
      %76 = dma.done [#allocation3], 128
    $region29: #{tpu_custom_call.1} parent=1 // pred_fallthru
      _
    // Predicated region
    $region30: #{tpu_custom_call.1} parent=1 // pred_check
      _
    $region31: #{tpu_custom_call.1} parent=1 // pred_check_branch
      %78 = sbr.rel (0) target = $region33
    $region32: #{tpu_custom_call.1} parent=1 // pred_region
      %79 = dma.done [#allocation6], 128
    $region33: #{tpu_custom_call.1} parent=1 // pred_fallthru
      _
    // Predicated region
    $region34: #{tpu_custom_call.1} parent=1 // pred_check
      _
    $region35: #{tpu_custom_call.1} parent=1 // pred_check_branch
      %81 = sbr.rel (0) target = $region37
    $region36: #{tpu_custom_call.1} parent=1 // pred_region
      %82 = dma.done [#allocation6], 128
    $region37: #{tpu_custom_call.1} parent=1 // pred_fallthru
      _
    // Predicated region
    $region38: #{tpu_custom_call.1} parent=1 // pred_check
      _
    $region39: #{tpu_custom_call.1} parent=1 // pred_check_branch
      %84 = sbr.rel (0) target = $region41
    $region40: #{tpu_custom_call.1} parent=1 // pred_region
      %85 = dma.done [#allocation9], 512
    $region41: #{tpu_custom_call.1} parent=1 // pred_fallthru
      _
    // Predicated region
    $region42: #{tpu_custom_call.1} parent=1 // pred_check
      _
    $region43: #{tpu_custom_call.1} parent=1 // pred_check_branch
      %87 = sbr.rel (0) target = $region45
    $region44: #{tpu_custom_call.1} parent=1 // pred_region
      %88 = dma.done [#allocation9], 1024
    $region45: #{tpu_custom_call.1} parent=1 // pred_fallthru
      _
    %v90 = vld [vmem:[#allocation2] sm:$0xff]
    %v91 = vpack.c.bf16 %v90, %v90
    %v92 = vld [vmem:[#allocation8] sm:$0xff]
    %v93 = vld [vmem:[#allocation8 + $0x8] sm:$0xff]
    %v94 = vld [vmem:[#allocation8 + $0x10] sm:$0xff]
    %v95 = vld [vmem:[#allocation8 + $0x18] sm:$0xff]
    %v96 = vld [vmem:[#allocation5] sm:$0xff]
    %v97 = vpack.c.bf16 %v96, %v96
    %v98 = vld [vmem:[#allocation10] sm:$0xff]
    %v99 = vld [vmem:[#allocation10 + $0x8] sm:$0xff]
    %v100 = vld [vmem:[#allocation10 + $0x10] sm:$0xff]
    %v101 = vld [vmem:[#allocation10 + $0x18] sm:$0xff]
    %v102 = vld [vmem:[#allocation10 + $0x20] sm:$0xff]
    %v103 = vld [vmem:[#allocation10 + $0x28] sm:$0xff]
    %v104 = vld [vmem:[#allocation10 + $0x30] sm:$0xff]
    %v105 = vld [vmem:[#allocation10 + $0x38] sm:$0xff]
    %v114 = vunpack.c.l.b16 %v98
    %v115 = vunpack.c.h.b16 %v98
    %v116 = vunpack.c.l.b16 %v99
    %v117 = vunpack.c.h.b16 %v99
    %v118 = vunpack.c.l.b16 %v100
    %v119 = vunpack.c.h.b16 %v100
    %v120 = vunpack.c.l.b16 %v101
    %v121 = vunpack.c.h.b16 %v101
    %v122 = vunpack.c.l.b16 %v102
    %v123 = vunpack.c.h.b16 %v102
    %v124 = vunpack.c.l.b16 %v103
    %v125 = vunpack.c.h.b16 %v103
    %v126 = vunpack.c.l.b16 %v104
    %v127 = vunpack.c.h.b16 %v104
    %v128 = vunpack.c.l.b16 %v105
    %v129 = vunpack.c.h.b16 %v105
    %v130 = vpack.c.b16 %v118, %v114
    %v131 = vpack.c.b16 %v119, %v115
    %v132 = vpack.c.b16 %v120, %v116
    %v133 = vpack.c.b16 %v121, %v117
    %v134 = vpack.c.b16 %v126, %v122
    %v135 = vpack.c.b16 %v127, %v123
    %v136 = vpack.c.b16 %v128, %v124
    %v137 = vpack.c.b16 %v129, %v125
    %vm146 = vcmask 261120
    %v148 = vsel %vm146, %v97, 0
    %150 = vmatprep.subr.bf16.mxu0 0
    %151 = vmatpush1.bf16.msra.mxu0 0
    %152 = vmatprep.subr.bf16.mxu0 0
    %153 = vmatpush1.bf16.msra.mxu0 0
    %154 = vmatprep.subr.bf16.mxu0 0
    %155 = vmatpush1.bf16.msra.mxu0 0
    %156 = vmatprep.subr.bf16.mxu0 0
    %157 = vmatpush1.bf16.msra.mxu0 0
    %158 = vmatprep.subr.bf16.mxu0 0
    %159 = vmatpush1.bf16.msra.mxu0 0
    %160 = vmatprep.subr.bf16.mxu0 0
    %161 = vmatpush1.bf16.msra.mxu0 0
    %162 = vmatprep.subr.bf16.mxu0 %v135
    %163 = vmatpush1.bf16.msra.mxu0 %v134
    %164 = vmatprep.subr.bf16.mxu0 %v131
    %165 = vmatpush1.bf16.msra.mxu0 %v130
    %166 = vmatprep.subr.bf16.mxu0 0
    %167 = vmatpush2.bf16.msra.mxu0 0
    %168 = vmatprep.subr.bf16.mxu0 0
    %169 = vmatpush2.bf16.msra.mxu0 0
    %170 = vmatprep.subr.bf16.mxu0 0
    %171 = vmatpush2.bf16.msra.mxu0 0
    %172 = vmatprep.subr.bf16.mxu0 0
    %173 = vmatpush2.bf16.msra.mxu0 0
    %174 = vmatprep.subr.bf16.mxu0 0
    %175 = vmatpush2.bf16.msra.mxu0 0
    %176 = vmatprep.subr.bf16.mxu0 0
    %177 = vmatpush2.bf16.msra.mxu0 0
    %178 = vmatprep.subr.bf16.mxu0 0
    %179 = vmatpush2.bf16.msra.mxu0 0
    %180 = vmatprep.subr.bf16.mxu0 0
    %181 = vmatpush2.bf16.msra.mxu0 0
    %182 = vmatprep.mubr.bf16.mxu0 0
    %183 = vmatmul.mubr.bf16.gmra.mxu0 %v148
    %v184 = vpop.f32.mrf.mxu0
    %v185 = vadd.f32 0.0, %v184
    %v186 = vpop.f32.mrf.mxu0
    %v187 = vadd.f32 0.0, %v186
    %v188 = vpop.f32.mrf.mxu0
    %v189 = vpop.f32.mrf.mxu0
    %190 = vdwg.mxu0
    %191 = vmatprep.subr.bf16.mxu0 0
    %192 = vmatpush1.bf16.msra.mxu0 0
    %193 = vmatprep.subr.bf16.mxu0 0
    %194 = vmatpush1.bf16.msra.mxu0 0
    %195 = vmatprep.subr.bf16.mxu0 0
    %196 = vmatpush1.bf16.msra.mxu0 0
    %197 = vmatprep.subr.bf16.mxu0 0
    %198 = vmatpush1.bf16.msra.mxu0 0
    %199 = vmatprep.subr.bf16.mxu0 0
    %200 = vmatpush1.bf16.msra.mxu0 0
    %201 = vmatprep.subr.bf16.mxu0 0
    %202 = vmatpush1.bf16.msra.mxu0 0
    %203 = vmatprep.subr.bf16.mxu0 %v137
    %204 = vmatpush1.bf16.msra.mxu0 %v136
    %205 = vmatprep.subr.bf16.mxu0 %v133
    %206 = vmatpush1.bf16.msra.mxu0 %v132
    %207 = vmatprep.subr.bf16.mxu0 0
    %208 = vmatpush2.bf16.msra.mxu0 0
    %209 = vmatprep.subr.bf16.mxu0 0
    %210 = vmatpush2.bf16.msra.mxu0 0
    %211 = vmatprep.subr.bf16.mxu0 0
    %212 = vmatpush2.bf16.msra.mxu0 0
    %213 = vmatprep.subr.bf16.mxu0 0
    %214 = vmatpush2.bf16.msra.mxu0 0
    %215 = vmatprep.subr.bf16.mxu0 0
    %216 = vmatpush2.bf16.msra.mxu0 0
    %217 = vmatprep.subr.bf16.mxu0 0
    %218 = vmatpush2.bf16.msra.mxu0 0
    %219 = vmatprep.subr.bf16.mxu0 0
    %220 = vmatpush2.bf16.msra.mxu0 0
    %221 = vmatprep.subr.bf16.mxu0 0
    %222 = vmatpush2.bf16.msra.mxu0 0
    %223 = vmatprep.mubr.bf16.mxu0 0
    %224 = vmatmul.mubr.bf16.gmra.mxu0 %v148
    %v225 = vpop.f32.mrf.mxu0
    %v226 = vadd.f32 0.0, %v225
    %v227 = vpop.f32.mrf.mxu0
    %v228 = vadd.f32 0.0, %v227
    %v229 = vpop.f32.mrf.mxu0
    %v230 = vpop.f32.mrf.mxu0
    %231 = vdwg.mxu0
    %v236 = vunpack.c.l.b16 %v92
    %v237 = vunpack.c.h.b16 %v92
    %v238 = vunpack.c.l.b16 %v93
    %v239 = vunpack.c.h.b16 %v93
    %v240 = vunpack.c.l.b16 %v94
    %v241 = vunpack.c.h.b16 %v94
    %v242 = vunpack.c.l.b16 %v95
    %v243 = vunpack.c.h.b16 %v95
    %v244 = vpack.c.b16 %v240, %v236
    %v245 = vpack.c.b16 %v241, %v237
    %v246 = vpack.c.b16 %v242, %v238
    %v247 = vpack.c.b16 %v243, %v239
    %vm252 = vcmask 130048
    %v254 = vsel %vm252, %v91, 0
    %256 = vmatprep.subr.bf16.mxu0 0
    %257 = vmatpush1.bf16.msra.mxu0 0
    %258 = vmatprep.subr.bf16.mxu0 0
    %259 = vmatpush1.bf16.msra.mxu0 0
    %260 = vmatprep.subr.bf16.mxu0 0
    %261 = vmatpush1.bf16.msra.mxu0 0
    %262 = vmatprep.subr.bf16.mxu0 0
    %263 = vmatpush1.bf16.msra.mxu0 0
    %264 = vmatprep.subr.bf16.mxu0 0
    %265 = vmatpush1.bf16.msra.mxu0 0
    %266 = vmatprep.subr.bf16.mxu0 0
    %267 = vmatpush1.bf16.msra.mxu0 0
    %268 = vmatprep.subr.bf16.mxu0 0
    %269 = vmatpush1.bf16.msra.mxu0 0
    %270 = vmatprep.subr.bf16.mxu0 %v245
    %271 = vmatpush1.bf16.msra.mxu0 %v244
    %272 = vmatprep.subr.bf16.mxu0 0
    %273 = vmatpush2.bf16.msra.mxu0 0
    %274 = vmatprep.subr.bf16.mxu0 0
    %275 = vmatpush2.bf16.msra.mxu0 0
    %276 = vmatprep.subr.bf16.mxu0 0
    %277 = vmatpush2.bf16.msra.mxu0 0
    %278 = vmatprep.subr.bf16.mxu0 0
    %279 = vmatpush2.bf16.msra.mxu0 0
    %280 = vmatprep.subr.bf16.mxu0 0
    %281 = vmatpush2.bf16.msra.mxu0 0
    %282 = vmatprep.subr.bf16.mxu0 0
    %283 = vmatpush2.bf16.msra.mxu0 0
    %284 = vmatprep.subr.bf16.mxu0 0
    %285 = vmatpush2.bf16.msra.mxu0 0
    %286 = vmatprep.subr.bf16.mxu0 0
    %287 = vmatpush2.bf16.msra.mxu0 0
    %288 = vmatprep.mubr.bf16.mxu0 0
    %289 = vmatmul.mubr.bf16.gmra.mxu0 %v254
    %v290 = vpop.f32.mrf.mxu0
    %v291 = vadd.f32 %v185, %v290
    %v292 = vpop.f32.mrf.mxu0
    %v293 = vadd.f32 %v187, %v292
    %v294 = vpop.f32.mrf.mxu0
    %v295 = vpop.f32.mrf.mxu0
    %296 = vdwg.mxu0
    %297 = vmatprep.subr.bf16.mxu0 0
    %298 = vmatpush1.bf16.msra.mxu0 0
    %299 = vmatprep.subr.bf16.mxu0 0
    %300 = vmatpush1.bf16.msra.mxu0 0
    %301 = vmatprep.subr.bf16.mxu0 0
    %302 = vmatpush1.bf16.msra.mxu0 0
    %303 = vmatprep.subr.bf16.mxu0 0
    %304 = vmatpush1.bf16.msra.mxu0 0
    %305 = vmatprep.subr.bf16.mxu0 0
    %306 = vmatpush1.bf16.msra.mxu0 0
    %307 = vmatprep.subr.bf16.mxu0 0
    %308 = vmatpush1.bf16.msra.mxu0 0
    %309 = vmatprep.subr.bf16.mxu0 0
    %310 = vmatpush1.bf16.msra.mxu0 0
    %311 = vmatprep.subr.bf16.mxu0 %v247
    %312 = vmatpush1.bf16.msra.mxu0 %v246
    %313 = vmatprep.subr.bf16.mxu0 0
    %314 = vmatpush2.bf16.msra.mxu0 0
    %315 = vmatprep.subr.bf16.mxu0 0
    %316 = vmatpush2.bf16.msra.mxu0 0
    %317 = vmatprep.subr.bf16.mxu0 0
    %318 = vmatpush2.bf16.msra.mxu0 0
    %319 = vmatprep.subr.bf16.mxu0 0
    %320 = vmatpush2.bf16.msra.mxu0 0
    %321 = vmatprep.subr.bf16.mxu0 0
    %322 = vmatpush2.bf16.msra.mxu0 0
    %323 = vmatprep.subr.bf16.mxu0 0
    %324 = vmatpush2.bf16.msra.mxu0 0
    %325 = vmatprep.subr.bf16.mxu0 0
    %326 = vmatpush2.bf16.msra.mxu0 0
    %327 = vmatprep.subr.bf16.mxu0 0
    %328 = vmatpush2.bf16.msra.mxu0 0
    %329 = vmatprep.mubr.bf16.mxu0 0
    %330 = vmatmul.mubr.bf16.gmra.mxu0 %v254
    %v331 = vpop.f32.mrf.mxu0
    %v332 = vadd.f32 %v226, %v331
    %v333 = vpop.f32.mrf.mxu0
    %v334 = vadd.f32 %v228, %v333
    %v335 = vpop.f32.mrf.mxu0
    %v336 = vpop.f32.mrf.mxu0
    %337 = vdwg.mxu0
    %v338 = vld [vmem:[%s5] sm:$0xf]
    %v340 = vlaneseq
    %v341 = vshrl.u32 %v340, 7
    %v342 = vsub.s32 0, %v341
    %v343 = vrot.slane %v338, %v342
    %v344 = vlaneseq
    %v345 = vshrl.u32 %v344, 7
    %v346 = vsub.s32 1, %v345
    %v347 = vrot.slane %v338, %v346
    %v348 = vlaneseq
    %v349 = vshrl.u32 %v348, 7
    %v350 = vsub.s32 2, %v349
    %v351 = vrot.slane %v338, %v350
    %v352 = vlaneseq
    %v353 = vshrl.u32 %v352, 7
    %v354 = vsub.s32 3, %v353
    %v355 = vrot.slane %v338, %v354
    %v360 = vadd.f32 %v291, %v343
    %v361 = vadd.f32 %v293, %v347
    %v362 = vadd.f32 %v332, %v351
    %v363 = vadd.f32 %v334, %v355
    %v364 = vtanh.pop %v360
    %v365 = vadd.f32 %v364, 1.0
    %v366 = vmul.f32 %v365, 0.5
    %v367 = vtanh.pop %v361
    %v368 = vadd.f32 %v367, 1.0
    %v369 = vmul.f32 %v368, 0.5
    %v370 = vtanh.pop %v362
    %v371 = vtanh.pop %v363
    %v372 = vadd.f32 %v371, 1.0
    %v373 = vmul.f32 %v372, 0.5
    %v374 = vld [vmem:[#allocation7] sm:$0xff]
    %v375 = vmul.f32 %v369, %v374
    %v376 = vmul.f32 %v366, %v370
    %v377 = vadd.f32 %v375, %v376
    %v378 = vtanh.pop %v377
    %v379 = vmul.f32 %v373, %v378
    %380 = vst.msk [vmem:[#allocation12] sm:$0xff] %vm146, %v377
    %v381 = vpack.c.bf16 %v379, %v379
    %vm382 = vcmask 257024
    %383 = vst.msk [vmem:[#allocation11] sm:$0xf] %vm382, %v381
    // Predicated region
    $region46: #{tpu_custom_call.1} parent=1 // pred_check
      _
    $region47: #{tpu_custom_call.1} parent=1 // pred_check_branch
      %385 = sbr.rel (0) target = $region49
    $region48: #{tpu_custom_call.1} parent=1 // pred_region
      %s387 = ssub.s32 64, 64
      %388 = vsyncadd [#allocation4], %s387
      %s390 = sshll.u32 [#allocation11], 4
      %s391 = int_to_ptr.vmem [resolvable:$true] %s390
      %393 = dma.vmem_to_hbm [thread:$0]  %s391, 64, %s6, [#allocation4]
    $region49: #{tpu_custom_call.1} parent=1 // pred_fallthru
      _
    // Predicated region
    $region50: #{tpu_custom_call.1} parent=1 // pred_check
      _
    $region51: #{tpu_custom_call.1} parent=1 // pred_check_branch
      %395 = sbr.rel (0) target = $region53
    $region52: #{tpu_custom_call.1} parent=1 // pred_region
      %s397 = ssub.s32 128, 128
      %398 = vsyncadd [#allocation13], %s397
      %s400 = sshll.u32 [#allocation12], 4
      %s401 = int_to_ptr.vmem [resolvable:$true] %s400
      %403 = dma.vmem_to_hbm [thread:$0]  %s401, 128, %s7, [#allocation13]
    $region53: #{tpu_custom_call.1} parent=1 // pred_fallthru
      _
    // Predicated region
    $region54: #{tpu_custom_call.1} parent=1 // pred_check
      _
    $region55: #{tpu_custom_call.1} parent=1 // pred_check_branch
      %405 = sbr.rel (0) target = $region57
    $region56: #{tpu_custom_call.1} parent=1 // pred_region
      %406 = dma.done [#allocation4], 64
    $region57: #{tpu_custom_call.1} parent=1 // pred_fallthru
      _
    // Predicated region
    $region58: #{tpu_custom_call.1} parent=1 // pred_check
      _
    $region59: #{tpu_custom_call.1} parent=1 // pred_check_branch
      %408 = sbr.rel (0) target = $region61
    $region60: #{tpu_custom_call.1} parent=1 // pred_region
      %409 = dma.done [#allocation13], 128
    $region61: #{tpu_custom_call.1} parent=1 // pred_fallthru
      _
    %410 = vsyncpa [#allocation3], 1
    %411 = vsyncpa [#allocation6], 1
    %412 = vsyncpa [#allocation9], 1
    %413 = vsyncpa [#allocation4], 1
    %414 = vsyncpa [#allocation13], 1

</llo_original>
